<compile_context>
chip_gen: v7x
topology: tpu7x:2x2x1
jax: 0.10.0
libtpu: 0.0.40
codegen_flags: <defaults>
</compile_context>

<pallas_src>
import jax
import jax.numpy as jnp
from jax.experimental import pallas as pl
from jax.experimental.pallas import tpu as pltpu


def _center_loss_kernel(o_ref, t_ref, loss_ref, acc_ref):
    j = pl.program_id(1)  # reduction axis: batch tiles within this shard

    @pl.when(j == 0)
    def _():
        acc_ref[...] = jnp.zeros_like(acc_ref)

    d = o_ref[...].astype(jnp.float32) - t_ref[...].astype(jnp.float32)
    acc_ref[...] += d * d  # pure VPU elementwise accumulate (stays in vregs)

    @pl.when(j == pl.num_programs(1) - 1)
    def _():
        # Single cross-lane reduce per shard; broadcast-store the scalar into
        # the shard's (1, 8, 128) output block (unmasked, lane-dense store).
        s = jnp.sum(acc_ref[...])
        loss_ref[...] = jnp.full(loss_ref.shape, s, dtype=loss_ref.dtype)


def center_loss(outputs, targets, *, block_bytes=4 * 1024 * 1024, num_parallel=2):
    """CenterLoss forward: sum-of-squares MSE divided by batch size."""
    assert outputs.shape == targets.shape and outputs.ndim == 2
    B, F = outputs.shape
    itemsize = jnp.dtype(outputs.dtype).itemsize

    # ---- pick the batch-tile size (rows per block, multiple of 8) ----------
    B8 = ((B + 7) // 8) * 8                                   # sublane multiple
    rows_budget = max(8, ((block_bytes // max(1, F * itemsize)) // 8) * 8)
    tb = min(rows_budget, B8)
    n_tiles = pl.cdiv(B8, tb)
    # Note: for extremely wide F an 8-row block may exceed the VMEM budget;
    # a feature-axis tiling fallback would be needed in that regime.

    # ---- split the batch tiles across parallel shards (v7x: 2 TCs) ---------
    n_par = num_parallel if n_tiles >= num_parallel else 1
    tiles_per_shard = pl.cdiv(n_tiles, n_par)
    Bp = n_par * tiles_per_shard * tb                         # padded batch

    if Bp != B:
        pad = ((0, Bp - B), (0, 0))                           # zeros add 0 to sum
        outputs = jnp.pad(outputs, pad)
        targets = jnp.pad(targets, pad)

    partials = pl.pallas_call(
        _center_loss_kernel,
        out_shape=jax.ShapeDtypeStruct((n_par, 8, 128), jnp.float32),
        grid_spec=pltpu.PrefetchScalarGridSpec(
            num_scalar_prefetch=0,
            grid=(n_par, tiles_per_shard),
            in_specs=[
                pl.BlockSpec((tb, F), lambda p, j: (p * tiles_per_shard + j, 0)),
                pl.BlockSpec((tb, F), lambda p, j: (p * tiles_per_shard + j, 0)),
            ],
            out_specs=pl.BlockSpec((1, 8, 128), lambda p, j: (p, 0, 0)),
            scratch_shapes=[pltpu.VMEM((tb, F), jnp.float32)],
        ),
        compiler_params=pltpu.CompilerParams(
            dimension_semantics=("parallel", "arbitrary"),
            vmem_limit_bytes=32 * 1024 * 1024,
        ),
    )(outputs, targets)

    # One scalar partial sum per shard lives at [:, 0, 0].
    return jnp.sum(partials[:, 0, 0]) / jnp.float32(B)


if __name__ == "__main__":
    key = jax.random.PRNGKey(0)
    k1, k2 = jax.random.split(key)

    # Small WS-DAN-like shapes: batch of 8 attention-pooled feature vectors.
    B, F = 8, 256
    outputs = jax.random.normal(k1, (B, F), dtype=jnp.float32)
    targets = jax.random.normal(k2, (B, F), dtype=jnp.float32)

    loss = jax.block_until_ready(center_loss(outputs, targets))
    ref = jnp.sum((outputs - targets) ** 2) / B
    assert jnp.allclose(loss, ref, rtol=1e-5, atol=1e-5), (loss, ref)

    # Second check exercising batch padding, multi-tile grid and the
    # parallel-shard path (tiny block budget forces >1 tile).
    B2, F2 = 13, 384
    o2 = jax.random.normal(k1, (B2, F2), dtype=jnp.bfloat16)
    t2 = jax.random.normal(k2, (B2, F2), dtype=jnp.bfloat16)
    loss2 = jax.block_until_ready(center_loss(o2, t2, block_bytes=8 * 1024))
    ref2 = jnp.sum((o2.astype(jnp.float32) - t2.astype(jnp.float32)) ** 2) / B2
    assert jnp.allclose(loss2, ref2, rtol=1e-3, atol=1e-3), (loss2, ref2)

    print("KERNEL_OK")
</pallas_src>

<mosaic_0001>
module attributes {stable_mosaic.version = 11 : i64} {
  func.func @_center_loss_kernel(%arg0: i32, %arg1: i32, %arg2: memref<8x256xf32, #tpu.memory_space<vmem>>, %arg3: memref<8x256xf32, #tpu.memory_space<vmem>>, %arg4: memref<1x8x128xf32, #tpu.memory_space<vmem>>, %arg5: memref<8x256xf32, #tpu.memory_space<vmem>>) attributes {dimension_semantics = [#tpu.dimension_semantics<parallel>, #tpu.dimension_semantics<arbitrary>], iteration_bounds = array<i64: 1, 1>, scalar_prefetch = 0 : i64, scratch_operands = 1 : i64, tpu.core_type = #tpu.core_type<tc>, window_params = [{transform_indices = @transform_0, window_bounds = array<i64: 8, 256>}, {transform_indices = @transform_1, window_bounds = array<i64: 8, 256>}, {transform_indices = @transform_2, window_bounds = array<i64: 1, 8, 128>}]} {
    %c0_i32 = arith.constant 0 : i32
    %0 = arith.cmpi eq, %arg1, %c0_i32 : i32
    %1 = arith.extui %0 : i1 to i32
    %c0_i32_0 = arith.constant 0 : i32
    %2 = arith.cmpi ne, %1, %c0_i32_0 : i32
    scf.if %2 {
      %cst = arith.constant 0.000000e+00 : f32
      %13 = vector.broadcast %cst : f32 to vector<8x256xf32>
      %c0_10 = arith.constant 0 : index
      %c0_11 = arith.constant 0 : index
      %14 = vector.load %arg5[%c0_10, %c0_11] : memref<8x256xf32, #tpu.memory_space<vmem>>, vector<8x256xf32>
      tpu.vector_store %arg5[%c0_10, %c0_11], %13 {strides = array<i32>} : memref<8x256xf32, #tpu.memory_space<vmem>>, vector<8x256xf32>,
    } else {
    }
    %c0 = arith.constant 0 : index
    %c0_1 = arith.constant 0 : index
    %3 = vector.load %arg2[%c0, %c0_1] : memref<8x256xf32, #tpu.memory_space<vmem>>, vector<8x256xf32>
    %c0_2 = arith.constant 0 : index
    %c0_3 = arith.constant 0 : index
    %4 = vector.load %arg3[%c0_2, %c0_3] : memref<8x256xf32, #tpu.memory_space<vmem>>, vector<8x256xf32>
    %5 = arith.subf %3, %4 : vector<8x256xf32>
    %c0_4 = arith.constant 0 : index
    %c0_5 = arith.constant 0 : index
    %6 = vector.load %arg5[%c0_4, %c0_5] : memref<8x256xf32, #tpu.memory_space<vmem>>, vector<8x256xf32>
    %7 = arith.mulf %5, %5 : vector<8x256xf32>
    %8 = arith.addf %6, %7 : vector<8x256xf32>
    %c0_6 = arith.constant 0 : index
    %c0_7 = arith.constant 0 : index
    %9 = vector.load %arg5[%c0_6, %c0_7] : memref<8x256xf32, #tpu.memory_space<vmem>>, vector<8x256xf32>
    tpu.vector_store %arg5[%c0_6, %c0_7], %8 {strides = array<i32>} : memref<8x256xf32, #tpu.memory_space<vmem>>, vector<8x256xf32>,
    %c0_i32_8 = arith.constant 0 : i32
    %10 = arith.cmpi eq, %arg1, %c0_i32_8 : i32
    %11 = arith.extui %10 : i1 to i32
    %c0_i32_9 = arith.constant 0 : i32
    %12 = arith.cmpi ne, %11, %c0_i32_9 : i32
    scf.if %12 {
      %c0_10 = arith.constant 0 : index
      %c0_11 = arith.constant 0 : index
      %13 = vector.load %arg5[%c0_10, %c0_11] : memref<8x256xf32, #tpu.memory_space<vmem>>, vector<8x256xf32>
      %14 = vector.shape_cast %13 : vector<8x256xf32> to vector<1x8x256xf32>
      %cst = arith.constant dense<0.000000e+00> : vector<1xf32>
      %15 = vector.multi_reduction <add>, %14, %cst [1, 2] : vector<1x8x256xf32> to vector<1xf32>
      %16 = vector.shape_cast %15 : vector<1xf32> to vector<1x1x1xf32>
      %17 = vector.extract %16[0, 0, 0] : f32 from vector<1x1x1xf32>
      %18 = vector.broadcast %17 : f32 to vector<1x8x128xf32>
      %c0_12 = arith.constant 0 : index
      %c0_13 = arith.constant 0 : index
      %c0_14 = arith.constant 0 : index
      %19 = vector.load %arg4[%c0_12, %c0_13, %c0_14] : memref<1x8x128xf32, #tpu.memory_space<vmem>>, vector<1x8x128xf32>
      tpu.vector_store %arg4[%c0_12, %c0_13, %c0_14], %18 {strides = array<i32>} : memref<1x8x128xf32, #tpu.memory_space<vmem>>, vector<1x8x128xf32>,
    } else {
    }
    return
  }
  func.func @transform_0(%arg0: i32, %arg1: i32) -> (i32, i32) {
    %c1_i32 = arith.constant 1 : i32
    %0 = arith.muli %arg0, %c1_i32 : i32
    %1 = arith.addi %0, %arg1 : i32
    %c0_i32 = arith.constant 0 : i32
    %c0_i32_0 = arith.constant 0 : i32
    return %1, %c0_i32 : i32, i32
  }
  func.func @transform_1(%arg0: i32, %arg1: i32) -> (i32, i32) {
    %c1_i32 = arith.constant 1 : i32
    %0 = arith.muli %arg0, %c1_i32 : i32
    %1 = arith.addi %0, %arg1 : i32
    %c0_i32 = arith.constant 0 : i32
    %c0_i32_0 = arith.constant 0 : i32
    return %1, %c0_i32 : i32, i32
  }
  func.func @transform_2(%arg0: i32, %arg1: i32) -> (i32, i32, i32) {
    %c0_i32 = arith.constant 0 : i32
    %c0_i32_0 = arith.constant 0 : i32
    %c0_i32_1 = arith.constant 0 : i32
    return %arg0, %c0_i32, %c0_i32_0 : i32, i32, i32
  }
}

</mosaic_0001>

<llo_original>
// kernel: tpu_custom_call.1
$region0: #{tpu_custom_call.1}
  #allocation0 [shape = 'u32[]', space=smem, size = 0x4, offset = 0x4, fixed_abs, tag = 'smem constant byte address 0x4 - core index']
  #allocation1 [shape = 'u32[144,128]{1,0:T(1,128)}', space=vmem, size = 0x12000, scoped, tag = 'internal scratch']
  #allocation2 [shape = 'f32[8,256]{1,0:T(8,128)}', space=vmem, size = 0x2000, scoped, tag = 'scratch operand']
  %s0 = inlined_call_operand.hbm [shape: f32[8,256], index: 0, kind: input, shape index: {}]
  %s1 = inlined_call_operand.hbm [shape: f32[8,256], index: 1, kind: input, shape index: {}]
  %s2 = inlined_call_operand.hbm [shape: f32[1,8,128], index: 2, kind: output, shape index: {}]
  %s3 = sld [smem:[#allocation0]]
  $region34: #{tpu_custom_call.1} parent=0
    _
  %s5 = ssub.s32 1, %s3
  %s6 = scalar_select 0, %s5, %s3
  $region1: #{tpu_custom_call.1} parent=0
    #allocation3 [shape = 'u8[8192]{0}', space=vmem, size = 0x2000, scoped, tag = 'input window, operand 0, single buffered']
    #allocation4 [shape = 's32[1]{0}', space=sflag, size = 0x4, scoped, tag = 'scoped memory for tpu_custom_call.1']
    #allocation5 [shape = 's32[1]{0}', space=sflag, size = 0x4, scoped, tag = 'scoped memory for tpu_custom_call.1']
    #allocation6 [shape = 'u8[8192]{0}', space=vmem, size = 0x2000, scoped, tag = 'input window, operand 1, single buffered']
    #allocation7 [shape = 's32[1]{0}', space=sflag, size = 0x4, scoped, tag = 'scoped memory for tpu_custom_call.1']
    #allocation8 [shape = 'u8[4096]{0}', space=vmem, size = 0x1000, scoped, tag = 'output window, operand 0, single buffered']
    %7 = vsyncpa [#allocation4], 0
    %8 = vsyncpa [#allocation7], 0
    %9 = vsyncpa [#allocation5], 0
    // Predicated region
    $region2: #{tpu_custom_call.1} parent=1 // pred_check
      _
    $region3: #{tpu_custom_call.1} parent=1 // pred_check_branch
      %11 = sbr.rel (0) target = $region5
    $region4: #{tpu_custom_call.1} parent=1 // pred_region
      %s12 = sadd.s32 0, 0
      %s14 = ssub.s32 256, 256
      %15 = vsyncadd [#allocation4], %s14
      %s16 = smul.addr %s12, 2
      %s17 = smul.addr %s16, 128
      %s18 = scalar_lea.hbm %s0, %s17
      %s20 = sshll.u32 [#allocation3], 4
      %s21 = int_to_ptr.vmem [resolvable:$true] %s20
      %23 = dma.hbm_to_vmem [thread:$0]  %s18, 256, %s21, [#allocation4]
    $region5: #{tpu_custom_call.1} parent=1 // pred_fallthru
      _
    // Predicated region
    $region6: #{tpu_custom_call.1} parent=1 // pred_check
      _
    $region7: #{tpu_custom_call.1} parent=1 // pred_check_branch
      %25 = sbr.rel (0) target = $region9
    $region8: #{tpu_custom_call.1} parent=1 // pred_region
      %s26 = sadd.s32 0, 0
      %s28 = ssub.s32 256, 256
      %29 = vsyncadd [#allocation7], %s28
      %s30 = smul.addr %s26, 2
      %s31 = smul.addr %s30, 128
      %s32 = scalar_lea.hbm %s1, %s31
      %s34 = sshll.u32 [#allocation6], 4
      %s35 = int_to_ptr.vmem [resolvable:$true] %s34
      %37 = dma.hbm_to_vmem [thread:$0]  %s32, 256, %s35, [#allocation7]
    $region9: #{tpu_custom_call.1} parent=1 // pred_fallthru
      _
    // Predicated region
    $region10: #{tpu_custom_call.1} parent=1 // pred_check
      _
    $region11: #{tpu_custom_call.1} parent=1 // pred_check_branch
      %39 = sbr.rel (0) target = $region13
    $region12: #{tpu_custom_call.1} parent=1 // pred_region
      %40 = dma.done [#allocation4], 256
    $region13: #{tpu_custom_call.1} parent=1 // pred_fallthru
      _
    // Predicated region
    $region14: #{tpu_custom_call.1} parent=1 // pred_check
      _
    $region15: #{tpu_custom_call.1} parent=1 // pred_check_branch
      %42 = sbr.rel (0) target = $region17
    $region16: #{tpu_custom_call.1} parent=1 // pred_region
      %43 = dma.done [#allocation7], 256
    $region17: #{tpu_custom_call.1} parent=1 // pred_fallthru
      _
    %s44 = sadd.s32 0, 0
    %s45 = sadd.s32 0, 0
    %p46 = scmp.eq.s32.totalorder 0, 0
    // Predicated region
    $region18: #{tpu_custom_call.1} parent=1 // pred_check
      %p47 = pneg %p46
    $region19: #{tpu_custom_call.1} parent=1 // pred_check_branch
      %49 = sbr.rel (%p47) target = $region21
    $region20: #{tpu_custom_call.1} parent=1 // pred_region
      %50 = vst [vmem:[#allocation2] sm:$0xff] 0.0
      %51 = vst [vmem:[#allocation2 + $0x8] sm:$0xff] 0.0
    $region21: #{tpu_custom_call.1} parent=1 // pred_fallthru
      _
    %v52 = vld [vmem:[#allocation3] sm:$0xff]
    %v53 = vld [vmem:[#allocation3 + $0x8] sm:$0xff]
    %v54 = vld [vmem:[#allocation6] sm:$0xff]
    %v55 = vld [vmem:[#allocation6 + $0x8] sm:$0xff]
    %v56 = vsub.f32 %v52, %v54
    %v57 = vsub.f32 %v53, %v55
    %v58 = vld [vmem:[#allocation2] sm:$0xff]
    %v59 = vld [vmem:[#allocation2 + $0x8] sm:$0xff]
    %v60 = vmul.f32 %v56, %v56
    %v61 = vmul.f32 %v57, %v57
    %v62 = vadd.f32 %v58, %v60
    %v63 = vadd.f32 %v59, %v61
    %64 = vst [vmem:[#allocation2] sm:$0xff] %v62
    %65 = vst [vmem:[#allocation2 + $0x8] sm:$0xff] %v63
    // Predicated region
    $region22: #{tpu_custom_call.1} parent=1 // pred_check
      %p66 = pneg %p46
    $region23: #{tpu_custom_call.1} parent=1 // pred_check_branch
      %68 = sbr.rel (%p66) target = $region25
    $region24: #{tpu_custom_call.1} parent=1 // pred_region
      %v69 = vld [vmem:[#allocation2] sm:$0xff]
      %v70 = vld [vmem:[#allocation2 + $0x8] sm:$0xff]
      %v71 = vadd.f32 %v69, %v70
      %72 = vadd.xlane.f32.xlu0 %v71
      %v73 = vpop.xlane.xlu0 %72
      %v74 = vrot.slane %v73, 4
      %v75 = vadd.f32 %v73, %v74
      %v76 = vrot.slane %v75, 2
      %v77 = vadd.f32 %v75, %v76
      %v78 = vrot.slane %v77, 1
      %v79 = vadd.f32 %v77, %v78
      %s80 = vtos %v79
      %v81 = vstv %s80
      %82 = vst [vmem:[#allocation8] sm:$0xff] %v81
    $region25: #{tpu_custom_call.1} parent=1 // pred_fallthru
      _
    // Predicated region
    $region26: #{tpu_custom_call.1} parent=1 // pred_check
      _
    $region27: #{tpu_custom_call.1} parent=1 // pred_check_branch
      %84 = sbr.rel (0) target = $region29
    $region28: #{tpu_custom_call.1} parent=1 // pred_region
      %s86 = ssub.s32 128, 128
      %87 = vsyncadd [#allocation5], %s86
      %s89 = sshll.u32 [#allocation8], 4
      %s90 = int_to_ptr.vmem [resolvable:$true] %s89
      %92 = dma.vmem_to_hbm [thread:$0]  %s90, 128, %s2, [#allocation5]
    $region29: #{tpu_custom_call.1} parent=1 // pred_fallthru
      _
    // Predicated region
    $region30: #{tpu_custom_call.1} parent=1 // pred_check
      _
    $region31: #{tpu_custom_call.1} parent=1 // pred_check_branch
      %94 = sbr.rel (0) target = $region33
    $region32: #{tpu_custom_call.1} parent=1 // pred_region
      %95 = dma.done [#allocation5], 128
    $region33: #{tpu_custom_call.1} parent=1 // pred_fallthru
      _
    %96 = vsyncpa [#allocation4], 1
    %97 = vsyncpa [#allocation7], 1
    %98 = vsyncpa [#allocation5], 1

</llo_original>
